<compile_context>
chip_gen: v7x
topology: tpu7x:2x2x1
jax: 0.10.0
libtpu: 0.0.40
codegen_flags: <defaults>
</compile_context>

<pallas_src>
import jax
import jax.numpy as jnp
from jax.experimental import pallas as pl
from jax.experimental.pallas import tpu as pltpu


def _round_up(a, m):
    return (a + m - 1) // m * m


def _block_diag(w, n):
    """Replicate w (din, dout) n times along the diagonal -> (n*din, n*dout)."""
    din, dout = w.shape
    out = jnp.zeros((n * din, n * dout), w.dtype)
    for i in range(n):
        out = out.at[i * din:(i + 1) * din, i * dout:(i + 1) * dout].set(w)
    return out


def mydnn_kernel(x_ref, wcat_ref, bcat_ref, w2_ref, b2_ref, o_ref, *, split):
    # x_ref: (tbp, 128).  Each packed row holds `pack` independent logical rows
    # of D features; all weights are block-diagonal replicated, so the math per
    # logical row is identical to the unpacked module.
    x = x_ref[...]

    # Fused first layer: [dnn-Linear1 | scale-Linear] in one MXU pass.
    z = jnp.dot(x, wcat_ref[...], preferred_element_type=jnp.float32) + bcat_ref[...]
    h = jnp.maximum(z[:, :split], 0.0)            # (tbp, pack*H)  dnn hidden
    theta = jax.nn.sigmoid(z[:, split:])          # (tbp, 128)     scale gate

    # dnn second layer, already in the output lane layout.
    dnn_out = (jnp.dot(h, w2_ref[...], preferred_element_type=jnp.float32)
               + b2_ref[...])                     # (tbp, 128)

    o_ref[...] = (theta * dnn_out).astype(o_ref.dtype)


def mydnn_forward(x, params, *, tbp=512):
    """x: (B, D) float32 with 128 % D == 0. params from init_params ((in,out) layout)."""
    B, D = x.shape
    H = params["w1"].shape[1]
    assert 128 % D == 0, "feature dim must divide 128 for lane packing"
    pack = 128 // D                                   # logical rows per packed row

    # ---- lane-dense repacking + batch-remainder padding (wrapper side) ----
    r = _round_up(B, pack) // pack                    # packed rows actually needed
    tbp = min(tbp, _round_up(r, 8))                   # shrink tile for tiny batches
    r_pad = _round_up(r, tbp)
    b_pad = r_pad * pack
    x_pad = x if b_pad == B else jnp.pad(x, ((0, b_pad - B), (0, 0)))
    x_packed = x_pad.reshape(r_pad, pack * D)         # (R, 128): contiguous view

    # ---- block-diagonal replicated weights (one-time prep, ~320 KiB) ----
    w1 = _block_diag(params["w1"], pack)              # (128, pack*H)
    w2 = _block_diag(params["w2"], pack)              # (pack*H, 128)
    ws = _block_diag(params["ws"], pack)              # (128, 128)
    b1 = jnp.tile(params["b1"], (1, pack))            # (1, pack*H)
    b2 = jnp.tile(params["b2"], (1, pack))            # (1, 128)
    bs = jnp.tile(params["bs"], (1, pack))            # (1, 128)

    split = pack * H                                  # 128-aligned lane split point
    w_cat = jnp.concatenate([w1, ws], axis=1)         # (128, pack*H + 128)
    b_cat = jnp.concatenate([b1, bs], axis=1)         # (1,   pack*H + 128)

    full = lambda i: (0, 0)                           # weights: same block each step
    import functools
    kernel = functools.partial(mydnn_kernel, split=split)

    out_packed = pl.pallas_call(
        kernel,
        out_shape=jax.ShapeDtypeStruct((r_pad, pack * D), x.dtype),
        grid_spec=pltpu.PrefetchScalarGridSpec(
            num_scalar_prefetch=0,
            grid=(r_pad // tbp,),
            in_specs=[
                pl.BlockSpec((tbp, pack * D), lambda i: (i, 0)),   # packed X tile
                pl.BlockSpec(w_cat.shape, full),
                pl.BlockSpec(b_cat.shape, full),
                pl.BlockSpec(w2.shape, full),
                pl.BlockSpec(b2.shape, full),
            ],
            out_specs=pl.BlockSpec((tbp, pack * D), lambda i: (i, 0)),
        ),
        compiler_params=pltpu.CompilerParams(
            dimension_semantics=("parallel",)),
    )(x_packed, w_cat, b_cat, w2, b2)

    out = out_packed.reshape(b_pad, D)
    return out if b_pad == B else out[:B]


def init_params(key, D=32, H=64):
    ks = jax.random.split(key, 6)
    scale = lambda fan_in: 1.0 / jnp.sqrt(fan_in)
    # PyTorch Linear weight is (out, in); we store transposed (in, out).
    return {
        "w1": jax.random.uniform(ks[0], (D, H), jnp.float32, -scale(D), scale(D)),
        "b1": jax.random.uniform(ks[1], (1, H), jnp.float32, -scale(D), scale(D)),
        "w2": jax.random.uniform(ks[2], (H, D), jnp.float32, -scale(H), scale(H)),
        "b2": jax.random.uniform(ks[3], (1, D), jnp.float32, -scale(H), scale(H)),
        "ws": jax.random.uniform(ks[4], (D, D), jnp.float32, -scale(D), scale(D)),
        "bs": jax.random.uniform(ks[5], (1, D), jnp.float32, -scale(D), scale(D)),
    }


def mydnn_reference(x, p):
    h = jnp.maximum(x @ p["w1"] + p["b1"], 0.0)
    dnn_out = h @ p["w2"] + p["b2"]
    theta = jax.nn.sigmoid(x @ p["ws"] + p["bs"])
    return theta * dnn_out


if __name__ == "__main__":
    key = jax.random.PRNGKey(0)
    kx, kp = jax.random.split(key)

    # Small shapes; B chosen non-multiple of 4 to exercise the padding path.
    B, D, H = 203, 32, 64
    x = jax.random.normal(kx, (B, D), dtype=jnp.float32)
    params = init_params(kp, D=D, H=H)

    out = mydnn_forward(x, params)
    out = jax.block_until_ready(out)

    ref = mydnn_reference(x, params)
    assert out.shape == (B, D)
    assert jnp.allclose(out, ref, atol=1e-5, rtol=1e-5), "mismatch vs reference"

    print("KERNEL_OK")
</pallas_src>

<mosaic_0001>
module attributes {stable_mosaic.version = 11 : i64} {
  func.func @mydnn_kernel(%arg0: i32, %arg1: memref<56x128xf32, #tpu.memory_space<vmem>>, %arg2: memref<128x384xf32, #tpu.memory_space<vmem>>, %arg3: memref<1x384xf32, #tpu.memory_space<vmem>>, %arg4: memref<256x128xf32, #tpu.memory_space<vmem>>, %arg5: memref<1x128xf32, #tpu.memory_space<vmem>>, %arg6: memref<56x128xf32, #tpu.memory_space<vmem>>) attributes {dimension_semantics = [#tpu.dimension_semantics<parallel>], iteration_bounds = array<i64: 1>, scalar_prefetch = 0 : i64, scratch_operands = 0 : i64, tpu.core_type = #tpu.core_type<tc>, window_params = [{transform_indices = @transform_0, window_bounds = array<i64: 56, 128>}, {pipeline_mode = #tpu.pipeline_mode<synchronous>, transform_indices = @transform_1, window_bounds = array<i64: 128, 384>}, {pipeline_mode = #tpu.pipeline_mode<synchronous>, transform_indices = @transform_2, window_bounds = array<i64: 1, 384>}, {pipeline_mode = #tpu.pipeline_mode<synchronous>, transform_indices = @transform_3, window_bounds = array<i64: 256, 128>}, {pipeline_mode = #tpu.pipeline_mode<synchronous>, transform_indices = @transform_4, window_bounds = array<i64: 1, 128>}, {transform_indices = @transform_5, window_bounds = array<i64: 56, 128>}]} {
    %c0 = arith.constant 0 : index
    %c0_0 = arith.constant 0 : index
    %0 = vector.load %arg1[%c0, %c0_0] : memref<56x128xf32, #tpu.memory_space<vmem>>, vector<56x128xf32>
    %c0_1 = arith.constant 0 : index
    %c0_2 = arith.constant 0 : index
    %1 = vector.load %arg2[%c0_1, %c0_2] : memref<128x384xf32, #tpu.memory_space<vmem>>, vector<128x384xf32>
    %cst = arith.constant dense<0.000000e+00> : vector<56x384xf32>
    %2 = tpu.matmul %0, %1, %cst {dimension_numbers = #tpu.dot_dimension_numbers<[1], [0], [0], [1], [0, 0, 1, 1], [], []>} : vector<56x128xf32>, vector<128x384xf32>, vector<56x384xf32> -> vector<56x384xf32>
    %c0_3 = arith.constant 0 : index
    %c0_4 = arith.constant 0 : index
    %3 = vector.load %arg3[%c0_3, %c0_4] : memref<1x384xf32, #tpu.memory_space<vmem>>, vector<1x384xf32>
    %4 = vector.broadcast %3 : vector<1x384xf32> to vector<56x384xf32>
    %5 = arith.addf %2, %4 : vector<56x384xf32>
    %6 = vector.extract_strided_slice %5 {offsets = [0, 0], sizes = [56, 256], strides = [1, 1]} : vector<56x384xf32> to vector<56x256xf32>
    %cst_5 = arith.constant 0.000000e+00 : f32
    %7 = vector.broadcast %cst_5 : f32 to vector<56x256xf32>
    %8 = arith.maximumf %6, %7 : vector<56x256xf32>
    %9 = vector.extract_strided_slice %5 {offsets = [0, 256], sizes = [56, 128], strides = [1, 1]} : vector<56x384xf32> to vector<56x128xf32>
    %10 = arith.negf %9 : vector<56x128xf32>
    %11 = math.exp %10 : vector<56x128xf32>
    %cst_6 = arith.constant 1.000000e+00 : f32
    %12 = vector.broadcast %cst_6 : f32 to vector<56x128xf32>
    %13 = arith.addf %12, %11 : vector<56x128xf32>
    %14 = arith.divf %12, %13 : vector<56x128xf32>
    %c0_7 = arith.constant 0 : index
    %c0_8 = arith.constant 0 : index
    %15 = vector.load %arg4[%c0_7, %c0_8] : memref<256x128xf32, #tpu.memory_space<vmem>>, vector<256x128xf32>
    %cst_9 = arith.constant dense<0.000000e+00> : vector<56x128xf32>
    %16 = tpu.matmul %8, %15, %cst_9 {dimension_numbers = #tpu.dot_dimension_numbers<[1], [0], [0], [1], [0, 0, 1, 1], [], []>} : vector<56x256xf32>, vector<256x128xf32>, vector<56x128xf32> -> vector<56x128xf32>
    %c0_10 = arith.constant 0 : index
    %c0_11 = arith.constant 0 : index
    %17 = vector.load %arg5[%c0_10, %c0_11] : memref<1x128xf32, #tpu.memory_space<vmem>>, vector<1x128xf32>
    %18 = vector.broadcast %17 : vector<1x128xf32> to vector<56x128xf32>
    %19 = arith.addf %16, %18 : vector<56x128xf32>
    %20 = arith.mulf %14, %19 : vector<56x128xf32>
    %c0_12 = arith.constant 0 : index
    %c0_13 = arith.constant 0 : index
    %21 = vector.load %arg6[%c0_12, %c0_13] : memref<56x128xf32, #tpu.memory_space<vmem>>, vector<56x128xf32>
    tpu.vector_store %arg6[%c0_12, %c0_13], %20 {strides = array<i32>} : memref<56x128xf32, #tpu.memory_space<vmem>>, vector<56x128xf32>,
    return
  }
  func.func @transform_0(%arg0: i32) -> (i32, i32) {
    %c0_i32 = arith.constant 0 : i32
    %c0_i32_0 = arith.constant 0 : i32
    return %arg0, %c0_i32 : i32, i32
  }
  func.func @transform_1(%arg0: i32) -> (i32, i32) {
    %c0_i32 = arith.constant 0 : i32
    %c0_i32_0 = arith.constant 0 : i32
    %c0_i32_1 = arith.constant 0 : i32
    return %c0_i32, %c0_i32_0 : i32, i32
  }
  func.func @transform_2(%arg0: i32) -> (i32, i32) {
    %c0_i32 = arith.constant 0 : i32
    %c0_i32_0 = arith.constant 0 : i32
    %c0_i32_1 = arith.constant 0 : i32
    return %c0_i32, %c0_i32_0 : i32, i32
  }
  func.func @transform_3(%arg0: i32) -> (i32, i32) {
    %c0_i32 = arith.constant 0 : i32
    %c0_i32_0 = arith.constant 0 : i32
    %c0_i32_1 = arith.constant 0 : i32
    return %c0_i32, %c0_i32_0 : i32, i32
  }
  func.func @transform_4(%arg0: i32) -> (i32, i32) {
    %c0_i32 = arith.constant 0 : i32
    %c0_i32_0 = arith.constant 0 : i32
    %c0_i32_1 = arith.constant 0 : i32
    return %c0_i32, %c0_i32_0 : i32, i32
  }
  func.func @transform_5(%arg0: i32) -> (i32, i32) {
    %c0_i32 = arith.constant 0 : i32
    %c0_i32_0 = arith.constant 0 : i32
    return %arg0, %c0_i32 : i32, i32
  }
}

</mosaic_0001>

<llo_original>
// kernel: tpu_custom_call.1
$region0: #{tpu_custom_call.1}
  #allocation0 [shape = 'u32[]', space=smem, size = 0x4, offset = 0x4, fixed_abs, tag = 'smem constant byte address 0x4 - core index']
  #allocation1 [shape = 'u32[144,128]{1,0:T(1,128)}', space=vmem, size = 0x12000, scoped, tag = 'internal scratch']
  %s0 = inlined_call_operand.hbm [shape: f32[56,128], index: 0, kind: input, shape index: {}]
  %s1 = inlined_call_operand.hbm [shape: f32[128,384], index: 1, kind: input, shape index: {}]
  %s2 = inlined_call_operand.vmem [shape: f32[1,384], index: 2, kind: input, shape index: {}]
  %s3 = inlined_call_operand.hbm [shape: f32[256,128], index: 3, kind: input, shape index: {}]
  %s4 = inlined_call_operand.vmem [shape: f32[1,128], index: 4, kind: input, shape index: {}]
  %s5 = inlined_call_operand.hbm [shape: f32[56,128], index: 5, kind: output, shape index: {}]
  %s6 = sld [smem:[#allocation0]]
  $region42: #{tpu_custom_call.1} parent=0
    _
  %s8 = ssub.s32 1, %s6
  %s9 = scalar_select 0, %s8, %s6
  $region1: #{tpu_custom_call.1} parent=0
    #allocation2 [shape = 'u8[28672]{0}', space=vmem, size = 0x7000, scoped, tag = 'input window, operand 0, single buffered']
    #allocation3 [shape = 's32[1]{0}', space=sflag, size = 0x4, scoped, tag = 'scoped memory for tpu_custom_call.1']
    #allocation4 [shape = 's32[1]{0}', space=sflag, size = 0x4, scoped, tag = 'scoped memory for tpu_custom_call.1']
    #allocation5 [shape = 'u8[196608]{0}', space=vmem, size = 0x30000, scoped, tag = 'input window, operand 1, single buffered']
    #allocation6 [shape = 's32[1]{0}', space=sflag, size = 0x4, scoped, tag = 'scoped memory for tpu_custom_call.1']
    #allocation7 [shape = 'u8[131072]{0}', space=vmem, size = 0x20000, scoped, tag = 'input window, operand 3, single buffered']
    #allocation8 [shape = 'u8[28672]{0}', space=vmem, size = 0x7000, scoped, tag = 'output window, operand 0, single buffered']
    %10 = vsyncpa [#allocation3], 0
    %11 = vsyncpa [#allocation6], 0
    %12 = vsyncpa [#allocation4], 0
    // Predicated region
    $region2: #{tpu_custom_call.1} parent=1 // pred_check
      _
    $region3: #{tpu_custom_call.1} parent=1 // pred_check_branch
      %14 = sbr.rel (0) target = $region5
    $region4: #{tpu_custom_call.1} parent=1 // pred_region
      %s16 = ssub.s32 896, 896
      %17 = vsyncadd [#allocation3], %s16
      %s18 = sshll.u32 [#allocation2], 4
      %s19 = int_to_ptr.vmem [resolvable:$true] %s18
      %24 = dma.hbm_to_vmem [thread:$0]  %s0, 896, %s19, [#allocation3], 128, 128, 8
    $region5: #{tpu_custom_call.1} parent=1 // pred_fallthru
      _
    // Predicated region
    $region6: #{tpu_custom_call.1} parent=1 // pred_check
      _
    $region7: #{tpu_custom_call.1} parent=1 // pred_check_branch
      %26 = sbr.rel (0) target = $region9
    $region8: #{tpu_custom_call.1} parent=1 // pred_region
      %s28 = ssub.s32 6144, 6144
      %29 = vsyncadd [#allocation6], %s28
      %s30 = sshll.u32 [#allocation5], 4
      %s31 = int_to_ptr.vmem [resolvable:$true] %s30
      %36 = dma.hbm_to_vmem [thread:$0]  %s1, 6144, %s31, [#allocation6], 384, 384, 24
    $region9: #{tpu_custom_call.1} parent=1 // pred_fallthru
      _
    // Predicated region
    $region10: #{tpu_custom_call.1} parent=1 // pred_check
      _
    $region11: #{tpu_custom_call.1} parent=1 // pred_check_branch
      %38 = sbr.rel (0) target = $region13
    $region12: #{tpu_custom_call.1} parent=1 // pred_region
      _
    $region13: #{tpu_custom_call.1} parent=1 // pred_fallthru
      _
    // Predicated region
    $region14: #{tpu_custom_call.1} parent=1 // pred_check
      _
    $region15: #{tpu_custom_call.1} parent=1 // pred_check_branch
      %40 = sbr.rel (0) target = $region17
    $region16: #{tpu_custom_call.1} parent=1 // pred_region
      %s42 = ssub.s32 4096, 4096
      %43 = vsyncadd [#allocation6], %s42
      %s44 = sshll.u32 [#allocation7], 4
      %s45 = int_to_ptr.vmem [resolvable:$true] %s44
      %50 = dma.hbm_to_vmem [thread:$0]  %s3, 4096, %s45, [#allocation6], 128, 128, 8
    $region17: #{tpu_custom_call.1} parent=1 // pred_fallthru
      _
    // Predicated region
    $region18: #{tpu_custom_call.1} parent=1 // pred_check
      _
    $region19: #{tpu_custom_call.1} parent=1 // pred_check_branch
      %52 = sbr.rel (0) target = $region21
    $region20: #{tpu_custom_call.1} parent=1 // pred_region
      _
    $region21: #{tpu_custom_call.1} parent=1 // pred_fallthru
      _
    // Predicated region
    $region22: #{tpu_custom_call.1} parent=1 // pred_check
      _
    $region23: #{tpu_custom_call.1} parent=1 // pred_check_branch
      %54 = sbr.rel (0) target = $region25
    $region24: #{tpu_custom_call.1} parent=1 // pred_region
      %55 = dma.done [#allocation3], 896
    $region25: #{tpu_custom_call.1} parent=1 // pred_fallthru
      _
    // Predicated region
    $region26: #{tpu_custom_call.1} parent=1 // pred_check
      _
    $region27: #{tpu_custom_call.1} parent=1 // pred_check_branch
      %57 = sbr.rel (0) target = $region29
    $region28: #{tpu_custom_call.1} parent=1 // pred_region
      %58 = dma.done [#allocation6], 6144
    $region29: #{tpu_custom_call.1} parent=1 // pred_fallthru
      _
    // Predicated region
    $region30: #{tpu_custom_call.1} parent=1 // pred_check
      _
    $region31: #{tpu_custom_call.1} parent=1 // pred_check_branch
      %60 = sbr.rel (0) target = $region33
    $region32: #{tpu_custom_call.1} parent=1 // pred_region
      %61 = dma.done [#allocation6], 4096
    $region33: #{tpu_custom_call.1} parent=1 // pred_fallthru
      _
    %v62 = vld [vmem:[#allocation2] sm:$0xff]
    %v63 = vld [vmem:[#allocation2 + $0x8] sm:$0xff]
    %v64 = vld [vmem:[#allocation2 + $0x10] sm:$0xff]
    %v65 = vld [vmem:[#allocation2 + $0x18] sm:$0xff]
    %v66 = vld [vmem:[#allocation2 + $0x20] sm:$0xff]
    %v67 = vld [vmem:[#allocation2 + $0x28] sm:$0xff]
    %v68 = vld [vmem:[#allocation2 + $0x30] sm:$0xff]
    %v69 = vld [vmem:[#allocation5] sm:$0xff]
    %v70 = vld [vmem:[#allocation5 + $0x8] sm:$0xff]
    %v71 = vld [vmem:[#allocation5 + $0x10] sm:$0xff]
    %v72 = vld [vmem:[#allocation5 + $0x18] sm:$0xff]
    %v73 = vld [vmem:[#allocation5 + $0x20] sm:$0xff]
    %v74 = vld [vmem:[#allocation5 + $0x28] sm:$0xff]
    %v75 = vld [vmem:[#allocation5 + $0x30] sm:$0xff]
    %v76 = vld [vmem:[#allocation5 + $0x38] sm:$0xff]
    %v77 = vld [vmem:[#allocation5 + $0x40] sm:$0xff]
    %v78 = vld [vmem:[#allocation5 + $0x48] sm:$0xff]
    %v79 = vld [vmem:[#allocation5 + $0x50] sm:$0xff]
    %v80 = vld [vmem:[#allocation5 + $0x58] sm:$0xff]
    %v81 = vld [vmem:[#allocation5 + $0x60] sm:$0xff]
    %v82 = vld [vmem:[#allocation5 + $0x68] sm:$0xff]
    %v83 = vld [vmem:[#allocation5 + $0x70] sm:$0xff]
    %v84 = vld [vmem:[#allocation5 + $0x78] sm:$0xff]
    %v85 = vld [vmem:[#allocation5 + $0x80] sm:$0xff]
    %v86 = vld [vmem:[#allocation5 + $0x88] sm:$0xff]
    %v87 = vld [vmem:[#allocation5 + $0x90] sm:$0xff]
    %v88 = vld [vmem:[#allocation5 + $0x98] sm:$0xff]
    %v89 = vld [vmem:[#allocation5 + $0xa0] sm:$0xff]
    %v90 = vld [vmem:[#allocation5 + $0xa8] sm:$0xff]
    %v91 = vld [vmem:[#allocation5 + $0xb0] sm:$0xff]
    %v92 = vld [vmem:[#allocation5 + $0xb8] sm:$0xff]
    %v93 = vld [vmem:[#allocation5 + $0xc0] sm:$0xff]
    %v94 = vld [vmem:[#allocation5 + $0xc8] sm:$0xff]
    %v95 = vld [vmem:[#allocation5 + $0xd0] sm:$0xff]
    %v96 = vld [vmem:[#allocation5 + $0xd8] sm:$0xff]
    %v97 = vld [vmem:[#allocation5 + $0xe0] sm:$0xff]
    %v98 = vld [vmem:[#allocation5 + $0xe8] sm:$0xff]
    %v99 = vld [vmem:[#allocation5 + $0xf0] sm:$0xff]
    %v100 = vld [vmem:[#allocation5 + $0xf8] sm:$0xff]
    %v101 = vld [vmem:[#allocation5 + $0x100] sm:$0xff]
    %v102 = vld [vmem:[#allocation5 + $0x108] sm:$0xff]
    %v103 = vld [vmem:[#allocation5 + $0x110] sm:$0xff]
    %v104 = vld [vmem:[#allocation5 + $0x118] sm:$0xff]
    %v105 = vld [vmem:[#allocation5 + $0x120] sm:$0xff]
    %v106 = vld [vmem:[#allocation5 + $0x128] sm:$0xff]
    %v107 = vld [vmem:[#allocation5 + $0x130] sm:$0xff]
    %v108 = vld [vmem:[#allocation5 + $0x138] sm:$0xff]
    %v109 = vld [vmem:[#allocation5 + $0x140] sm:$0xff]
    %v110 = vld [vmem:[#allocation5 + $0x148] sm:$0xff]
    %v111 = vld [vmem:[#allocation5 + $0x150] sm:$0xff]
    %v112 = vld [vmem:[#allocation5 + $0x158] sm:$0xff]
    %v113 = vld [vmem:[#allocation5 + $0x160] sm:$0xff]
    %v114 = vld [vmem:[#allocation5 + $0x168] sm:$0xff]
    %v115 = vld [vmem:[#allocation5 + $0x170] sm:$0xff]
    %v116 = vld [vmem:[#allocation5 + $0x178] sm:$0xff]
    %v117 = vld [vmem:[%s2] sm:$0x7]
    %v119 = vlaneseq
    %v120 = vshrl.u32 %v119, 7
    %v121 = vsub.s32 0, %v120
    %v122 = vrot.slane %v117, %v121
    %v123 = vlaneseq
    %v124 = vshrl.u32 %v123, 7
    %v125 = vsub.s32 1, %v124
    %v126 = vrot.slane %v117, %v125
    %v127 = vlaneseq
    %v128 = vshrl.u32 %v127, 7
    %v129 = vsub.s32 2, %v128
    %v130 = vrot.slane %v117, %v129
    %134 = vmatprep.subr.mxu0 %v70
    %135 = vmatpush1.msra.mxu0 %v69
    %136 = vmatprep.subr.mxu0 %v73
    %137 = vmatpush1.msra.mxu0 %v72
    %138 = vmatprep.subr.mxu0 %v76
    %139 = vmatpush1.msra.mxu0 %v75
    %140 = vmatprep.subr.mxu0 %v79
    %141 = vmatpush1.msra.mxu0 %v78
    %142 = vmatprep.subr.mxu0 %v82
    %143 = vmatpush1.msra.mxu0 %v81
    %144 = vmatprep.subr.mxu0 %v85
    %145 = vmatpush1.msra.mxu0 %v84
    %146 = vmatprep.subr.mxu0 %v88
    %147 = vmatpush1.msra.mxu0 %v87
    %148 = vmatprep.subr.mxu0 %v91
    %149 = vmatpush1.msra.mxu0 %v90
    %150 = vmatprep.subr.mxu0 %v94
    %151 = vmatpush1.msra.mxu0 %v93
    %152 = vmatprep.subr.mxu0 %v97
    %153 = vmatpush1.msra.mxu0 %v96
    %154 = vmatprep.subr.mxu0 %v100
    %155 = vmatpush1.msra.mxu0 %v99
    %156 = vmatprep.subr.mxu0 %v103
    %157 = vmatpush1.msra.mxu0 %v102
    %158 = vmatprep.subr.mxu0 %v106
    %159 = vmatpush1.msra.mxu0 %v105
    %160 = vmatprep.subr.mxu0 %v109
    %161 = vmatpush1.msra.mxu0 %v108
    %162 = vmatprep.subr.mxu0 %v112
    %163 = vmatpush1.msra.mxu0 %v111
    %164 = vmatprep.subr.mxu0 %v115
    %165 = vmatpush1.msra.mxu0 %v114
    %166 = vmatprep.subr.mxu0 0.0
    %167 = vmatpush1.msra.mxu0 0.0
    %168 = vmatprep.subr.mxu0 0.0
    %169 = vmatpush1.msra.mxu0 0.0
    %170 = vmatprep.subr.mxu0 0.0
    %171 = vmatpush1.msra.mxu0 0.0
    %172 = vmatprep.subr.mxu0 0.0
    %173 = vmatpush1.msra.mxu0 0.0
    %174 = vmatprep.subr.mxu0 0.0
    %175 = vmatpush1.msra.mxu0 0.0
    %176 = vmatprep.subr.mxu0 0.0
    %177 = vmatpush1.msra.mxu0 0.0
    %178 = vmatprep.subr.mxu0 0.0
    %179 = vmatpush1.msra.mxu0 0.0
    %180 = vmatprep.subr.mxu0 0.0
    %181 = vmatpush1.msra.mxu0 0.0
    %182 = vmatprep.subr.mxu0 0.0
    %183 = vmatpush1.msra.mxu0 0.0
    %184 = vmatprep.subr.mxu0 0.0
    %185 = vmatpush1.msra.mxu0 0.0
    %186 = vmatprep.subr.mxu0 0.0
    %187 = vmatpush1.msra.mxu0 0.0
    %188 = vmatprep.subr.mxu0 0.0
    %189 = vmatpush1.msra.mxu0 0.0
    %190 = vmatprep.subr.mxu0 0.0
    %191 = vmatpush1.msra.mxu0 0.0
    %192 = vmatprep.subr.mxu0 0.0
    %193 = vmatpush1.msra.mxu0 0.0
    %194 = vmatprep.subr.mxu0 0.0
    %195 = vmatpush1.msra.mxu0 0.0
    %196 = vmatprep.subr.mxu0 0.0
    %197 = vmatpush1.msra.mxu0 0.0
    %198 = vmatprep.mubr.f32.mxu0 0.0
    %199 = vmatmul.mubr.f32.gmra.mrb[0].mxu0 %v62
    %v200 = vpop.f32.mrb[0].mxu0
    %v201 = vadd.f32 %v122, %v200
    %v202 = vpop.f32.mrb[0].mxu0
    %v203 = vadd.f32 %v126, %v202
    %204 = vmatprep.mubr.f32.mxu0 0.0
    %205 = vmatmul.mubr.f32.gmra.mrb[0].mxu0 %v63
    %v206 = vpop.f32.mrb[0].mxu0
    %v207 = vadd.f32 %v122, %v206
    %v208 = vpop.f32.mrb[0].mxu0
    %v209 = vadd.f32 %v126, %v208
    %210 = vmatprep.mubr.f32.mxu0 0.0
    %211 = vmatmul.mubr.f32.gmra.mrb[0].mxu0 %v64
    %v212 = vpop.f32.mrb[0].mxu0
    %v213 = vadd.f32 %v122, %v212
    %v214 = vpop.f32.mrb[0].mxu0
    %v215 = vadd.f32 %v126, %v214
    %216 = vmatprep.mubr.f32.mxu0 0.0
    %217 = vmatmul.mubr.f32.gmra.mrb[0].mxu0 %v65
    %v218 = vpop.f32.mrb[0].mxu0
    %v219 = vadd.f32 %v122, %v218
    %v220 = vpop.f32.mrb[0].mxu0
    %v221 = vadd.f32 %v126, %v220
    %222 = vmatprep.mubr.f32.mxu0 0.0
    %223 = vmatmul.mubr.f32.gmra.mrb[0].mxu0 %v66
    %v224 = vpop.f32.mrb[0].mxu0
    %v225 = vadd.f32 %v122, %v224
    %v226 = vpop.f32.mrb[0].mxu0
    %v227 = vadd.f32 %v126, %v226
    %228 = vmatprep.mubr.f32.mxu0 0.0
    %229 = vmatmul.mubr.f32.gmra.mrb[0].mxu0 %v67
    %v230 = vpop.f32.mrb[0].mxu0
    %v231 = vadd.f32 %v122, %v230
    %v232 = vpop.f32.mrb[0].mxu0
    %v233 = vadd.f32 %v126, %v232
    %234 = vmatprep.mubr.f32.mxu0 0.0
    %235 = vmatmul.mubr.f32.gmra.mrb[0].mxu0 %v68
    %v236 = vpop.f32.mrb[0].mxu0
    %v237 = vadd.f32 %v122, %v236
    %v238 = vpop.f32.mrb[0].mxu0
    %v239 = vadd.f32 %v126, %v238
    %240 = vdwg.mxu0
    %241 = vmatprep.subr.mxu0 0.0
    %242 = vmatpush1.msra.mxu0 %v71
    %243 = vmatprep.subr.mxu0 0.0
    %244 = vmatpush1.msra.mxu0 %v74
    %245 = vmatprep.subr.mxu0 0.0
    %246 = vmatpush1.msra.mxu0 %v77
    %247 = vmatprep.subr.mxu0 0.0
    %248 = vmatpush1.msra.mxu0 %v80
    %249 = vmatprep.subr.mxu0 0.0
    %250 = vmatpush1.msra.mxu0 %v83
    %251 = vmatprep.subr.mxu0 0.0
    %252 = vmatpush1.msra.mxu0 %v86
    %253 = vmatprep.subr.mxu0 0.0
    %254 = vmatpush1.msra.mxu0 %v89
    %255 = vmatprep.subr.mxu0 0.0
    %256 = vmatpush1.msra.mxu0 %v92
    %257 = vmatprep.subr.mxu0 0.0
    %258 = vmatpush1.msra.mxu0 %v95
    %259 = vmatprep.subr.mxu0 0.0
    %260 = vmatpush1.msra.mxu0 %v98
    %261 = vmatprep.subr.mxu0 0.0
    %262 = vmatpush1.msra.mxu0 %v101
    %263 = vmatprep.subr.mxu0 0.0
    %264 = vmatpush1.msra.mxu0 %v104
    %265 = vmatprep.subr.mxu0 0.0
    %266 = vmatpush1.msra.mxu0 %v107
    %267 = vmatprep.subr.mxu0 0.0
    %268 = vmatpush1.msra.mxu0 %v110
    %269 = vmatprep.subr.mxu0 0.0
    %270 = vmatpush1.msra.mxu0 %v113
    %271 = vmatprep.subr.mxu0 0.0
    %272 = vmatpush1.msra.mxu0 %v116
    %273 = vmatprep.subr.mxu0 0.0
    %274 = vmatpush1.msra.mxu0 0.0
    %275 = vmatprep.subr.mxu0 0.0
    %276 = vmatpush1.msra.mxu0 0.0
    %277 = vmatprep.subr.mxu0 0.0
    %278 = vmatpush1.msra.mxu0 0.0
    %279 = vmatprep.subr.mxu0 0.0
    %280 = vmatpush1.msra.mxu0 0.0
    %281 = vmatprep.subr.mxu0 0.0
    %282 = vmatpush1.msra.mxu0 0.0
    %283 = vmatprep.subr.mxu0 0.0
    %284 = vmatpush1.msra.mxu0 0.0
    %285 = vmatprep.subr.mxu0 0.0
    %286 = vmatpush1.msra.mxu0 0.0
    %287 = vmatprep.subr.mxu0 0.0
    %288 = vmatpush1.msra.mxu0 0.0
    %289 = vmatprep.subr.mxu0 0.0
    %290 = vmatpush1.msra.mxu0 0.0
    %291 = vmatprep.subr.mxu0 0.0
    %292 = vmatpush1.msra.mxu0 0.0
    %293 = vmatprep.subr.mxu0 0.0
    %294 = vmatpush1.msra.mxu0 0.0
    %295 = vmatprep.subr.mxu0 0.0
    %296 = vmatpush1.msra.mxu0 0.0
    %297 = vmatprep.subr.mxu0 0.0
    %298 = vmatpush1.msra.mxu0 0.0
    %299 = vmatprep.subr.mxu0 0.0
    %300 = vmatpush1.msra.mxu0 0.0
    %301 = vmatprep.subr.mxu0 0.0
    %302 = vmatpush1.msra.mxu0 0.0
    %303 = vmatprep.subr.mxu0 0.0
    %304 = vmatpush1.msra.mxu0 0.0
    %305 = vmatprep.mubr.f32.mxu0 0.0
    %306 = vmatmul.mubr.f32.gmra.mrb[0].mxu0 %v62
    %v307 = vpop.f32.mrb[0].mxu0
    %v308 = vadd.f32 %v130, %v307
    %v309 = vpop.f32.mrb[0].mxu0
    %310 = vmatprep.mubr.f32.mxu0 0.0
    %311 = vmatmul.mubr.f32.gmra.mrb[0].mxu0 %v63
    %v312 = vpop.f32.mrb[0].mxu0
    %v313 = vadd.f32 %v130, %v312
    %v314 = vpop.f32.mrb[0].mxu0
    %315 = vmatprep.mubr.f32.mxu0 0.0
    %316 = vmatmul.mubr.f32.gmra.mrb[0].mxu0 %v64
    %v317 = vpop.f32.mrb[0].mxu0
    %v318 = vadd.f32 %v130, %v317
    %v319 = vpop.f32.mrb[0].mxu0
    %320 = vmatprep.mubr.f32.mxu0 0.0
    %321 = vmatmul.mubr.f32.gmra.mrb[0].mxu0 %v65
    %v322 = vpop.f32.mrb[0].mxu0
    %v323 = vadd.f32 %v130, %v322
    %v324 = vpop.f32.mrb[0].mxu0
    %325 = vmatprep.mubr.f32.mxu0 0.0
    %326 = vmatmul.mubr.f32.gmra.mrb[0].mxu0 %v66
    %v327 = vpop.f32.mrb[0].mxu0
    %v328 = vadd.f32 %v130, %v327
    %v329 = vpop.f32.mrb[0].mxu0
    %330 = vmatprep.mubr.f32.mxu0 0.0
    %331 = vmatmul.mubr.f32.gmra.mrb[0].mxu0 %v67
    %v332 = vpop.f32.mrb[0].mxu0
    %v333 = vadd.f32 %v130, %v332
    %v334 = vpop.f32.mrb[0].mxu0
    %335 = vmatprep.mubr.f32.mxu0 0.0
    %336 = vmatmul.mubr.f32.gmra.mrb[0].mxu0 %v68
    %v337 = vpop.f32.mrb[0].mxu0
    %v338 = vadd.f32 %v130, %v337
    %v339 = vpop.f32.mrb[0].mxu0
    %340 = vdwg.mxu0
    %v341 = vmax.f32 %v201, 0.0
    %v342 = vmax.f32 %v203, 0.0
    %v343 = vmax.f32 %v207, 0.0
    %v344 = vmax.f32 %v209, 0.0
    %v345 = vmax.f32 %v213, 0.0
    %v346 = vmax.f32 %v215, 0.0
    %v347 = vmax.f32 %v219, 0.0
    %v348 = vmax.f32 %v221, 0.0
    %v349 = vmax.f32 %v225, 0.0
    %v350 = vmax.f32 %v227, 0.0
    %v351 = vmax.f32 %v231, 0.0
    %v352 = vmax.f32 %v233, 0.0
    %v353 = vmax.f32 %v237, 0.0
    %v354 = vmax.f32 %v239, 0.0
    %v355 = vxor.u32 %v308, 2147483648
    %v356 = vxor.u32 %v313, 2147483648
    %v357 = vxor.u32 %v318, 2147483648
    %v358 = vxor.u32 %v323, 2147483648
    %v359 = vxor.u32 %v328, 2147483648
    %v360 = vxor.u32 %v333, 2147483648
    %v361 = vxor.u32 %v338, 2147483648
    %v362 = vmul.f32 %v355, 1.442695
    %v363 = vpow.pop %v362
    %v364 = vmul.f32 %v356, 1.442695
    %v365 = vpow.pop %v364
    %v366 = vmul.f32 %v357, 1.442695
    %v367 = vpow.pop %v366
    %v368 = vmul.f32 %v358, 1.442695
    %v369 = vpow.pop %v368
    %v370 = vmul.f32 %v359, 1.442695
    %v371 = vpow.pop %v370
    %v372 = vmul.f32 %v360, 1.442695
    %v373 = vpow.pop %v372
    %v374 = vmul.f32 %v361, 1.442695
    %v375 = vpow.pop %v374
    %v376 = vadd.f32 %v363, 1.0
    %v377 = vadd.f32 %v365, 1.0
    %v378 = vadd.f32 %v367, 1.0
    %v379 = vadd.f32 %v369, 1.0
    %v380 = vadd.f32 %v371, 1.0
    %v381 = vadd.f32 %v373, 1.0
    %v382 = vadd.f32 %v375, 1.0
    %v383 = vrcp.pop %v376
    %v384 = vmul.f32 1.0, %v383
    %v385 = vrcp.pop %v377
    %v386 = vmul.f32 1.0, %v385
    %v387 = vrcp.pop %v378
    %v388 = vmul.f32 1.0, %v387
    %v389 = vrcp.pop %v379
    %v390 = vmul.f32 1.0, %v389
    %v391 = vrcp.pop %v380
    %v392 = vmul.f32 1.0, %v391
    %v393 = vrcp.pop %v381
    %v394 = vmul.f32 1.0, %v393
    %v395 = vrcp.pop %v382
    %v396 = vmul.f32 1.0, %v395
    %v397 = vld [vmem:[#allocation7] sm:$0xff]
    %v398 = vld [vmem:[#allocation7 + $0x8] sm:$0xff]
    %v399 = vld [vmem:[#allocation7 + $0x10] sm:$0xff]
    %v400 = vld [vmem:[#allocation7 + $0x18] sm:$0xff]
    %v401 = vld [vmem:[#allocation7 + $0x20] sm:$0xff]
    %v402 = vld [vmem:[#allocation7 + $0x28] sm:$0xff]
    %v403 = vld [vmem:[#allocation7 + $0x30] sm:$0xff]
    %v404 = vld [vmem:[#allocation7 + $0x38] sm:$0xff]
    %v405 = vld [vmem:[#allocation7 + $0x40] sm:$0xff]
    %v406 = vld [vmem:[#allocation7 + $0x48] sm:$0xff]
    %v407 = vld [vmem:[#allocation7 + $0x50] sm:$0xff]
    %v408 = vld [vmem:[#allocation7 + $0x58] sm:$0xff]
    %v409 = vld [vmem:[#allocation7 + $0x60] sm:$0xff]
    %v410 = vld [vmem:[#allocation7 + $0x68] sm:$0xff]
    %v411 = vld [vmem:[#allocation7 + $0x70] sm:$0xff]
    %v412 = vld [vmem:[#allocation7 + $0x78] sm:$0xff]
    %v413 = vld [vmem:[#allocation7 + $0x80] sm:$0xff]
    %v414 = vld [vmem:[#allocation7 + $0x88] sm:$0xff]
    %v415 = vld [vmem:[#allocation7 + $0x90] sm:$0xff]
    %v416 = vld [vmem:[#allocation7 + $0x98] sm:$0xff]
    %v417 = vld [vmem:[#allocation7 + $0xa0] sm:$0xff]
    %v418 = vld [vmem:[#allocation7 + $0xa8] sm:$0xff]
    %v419 = vld [vmem:[#allocation7 + $0xb0] sm:$0xff]
    %v420 = vld [vmem:[#allocation7 + $0xb8] sm:$0xff]
    %v421 = vld [vmem:[#allocation7 + $0xc0] sm:$0xff]
    %v422 = vld [vmem:[#allocation7 + $0xc8] sm:$0xff]
    %v423 = vld [vmem:[#allocation7 + $0xd0] sm:$0xff]
    %v424 = vld [vmem:[#allocation7 + $0xd8] sm:$0xff]
    %v425 = vld [vmem:[#allocation7 + $0xe0] sm:$0xff]
    %v426 = vld [vmem:[#allocation7 + $0xe8] sm:$0xff]
    %v427 = vld [vmem:[#allocation7 + $0xf0] sm:$0xff]
    %v428 = vld [vmem:[#allocation7 + $0xf8] sm:$0xff]
    %v429 = vld [vmem:[%s4] sm:$0x1]
    %v431 = vlaneseq
    %v432 = vshrl.u32 %v431, 7
    %v433 = vsub.s32 0, %v432
    %v434 = vrot.slane %v429, %v433
    %436 = vmatprep.subr.mxu0 0.0
    %437 = vmatpush1.msra.mxu0 %v397
    %438 = vmatprep.subr.mxu0 0.0
    %439 = vmatpush1.msra.mxu0 %v398
    %440 = vmatprep.subr.mxu0 0.0
    %441 = vmatpush1.msra.mxu0 %v399
    %442 = vmatprep.subr.mxu0 0.0
    %443 = vmatpush1.msra.mxu0 %v400
    %444 = vmatprep.subr.mxu0 0.0
    %445 = vmatpush1.msra.mxu0 %v401
    %446 = vmatprep.subr.mxu0 0.0
    %447 = vmatpush1.msra.mxu0 %v402
    %448 = vmatprep.subr.mxu0 0.0
    %449 = vmatpush1.msra.mxu0 %v403
    %450 = vmatprep.subr.mxu0 0.0
    %451 = vmatpush1.msra.mxu0 %v404
    %452 = vmatprep.subr.mxu0 0.0
    %453 = vmatpush1.msra.mxu0 %v405
    %454 = vmatprep.subr.mxu0 0.0
    %455 = vmatpush1.msra.mxu0 %v406
    %456 = vmatprep.subr.mxu0 0.0
    %457 = vmatpush1.msra.mxu0 %v407
    %458 = vmatprep.subr.mxu0 0.0
    %459 = vmatpush1.msra.mxu0 %v408
    %460 = vmatprep.subr.mxu0 0.0
    %461 = vmatpush1.msra.mxu0 %v409
    %462 = vmatprep.subr.mxu0 0.0
    %463 = vmatpush1.msra.mxu0 %v410
    %464 = vmatprep.subr.mxu0 0.0
    %465 = vmatpush1.msra.mxu0 %v411
    %466 = vmatprep.subr.mxu0 0.0
    %467 = vmatpush1.msra.mxu0 %v412
    %468 = vmatprep.subr.mxu0 0.0
    %469 = vmatpush1.msra.mxu0 %v413
    %470 = vmatprep.subr.mxu0 0.0
    %471 = vmatpush1.msra.mxu0 %v414
    %472 = vmatprep.subr.mxu0 0.0
    %473 = vmatpush1.msra.mxu0 %v415
    %474 = vmatprep.subr.mxu0 0.0
    %475 = vmatpush1.msra.mxu0 %v416
    %476 = vmatprep.subr.mxu0 0.0
    %477 = vmatpush1.msra.mxu0 %v417
    %478 = vmatprep.subr.mxu0 0.0
    %479 = vmatpush1.msra.mxu0 %v418
    %480 = vmatprep.subr.mxu0 0.0
    %481 = vmatpush1.msra.mxu0 %v419
    %482 = vmatprep.subr.mxu0 0.0
    %483 = vmatpush1.msra.mxu0 %v420
    %484 = vmatprep.subr.mxu0 0.0
    %485 = vmatpush1.msra.mxu0 %v421
    %486 = vmatprep.subr.mxu0 0.0
    %487 = vmatpush1.msra.mxu0 %v422
    %488 = vmatprep.subr.mxu0 0.0
    %489 = vmatpush1.msra.mxu0 %v423
    %490 = vmatprep.subr.mxu0 0.0
    %491 = vmatpush1.msra.mxu0 %v424
    %492 = vmatprep.subr.mxu0 0.0
    %493 = vmatpush1.msra.mxu0 %v425
    %494 = vmatprep.subr.mxu0 0.0
    %495 = vmatpush1.msra.mxu0 %v426
    %496 = vmatprep.subr.mxu0 0.0
    %497 = vmatpush1.msra.mxu0 %v427
    %498 = vmatprep.subr.mxu0 0.0
    %499 = vmatpush1.msra.mxu0 %v428
    %500 = vmatprep.mubr.f32.mxu0 %v342
    %501 = vmatmul.mubr.f32.gmra.mrb[0].mxu0 %v341
    %v502 = vpop.f32.mrb[0].mxu0
    %v503 = vadd.f32 %v434, %v502
    %v504 = vpop.f32.mrb[0].mxu0
    %505 = vmatprep.mubr.f32.mxu0 %v344
    %506 = vmatmul.mubr.f32.gmra.mrb[0].mxu0 %v343
    %v507 = vpop.f32.mrb[0].mxu0
    %v508 = vadd.f32 %v434, %v507
    %v509 = vpop.f32.mrb[0].mxu0
    %510 = vmatprep.mubr.f32.mxu0 %v346
    %511 = vmatmul.mubr.f32.gmra.mrb[0].mxu0 %v345
    %v512 = vpop.f32.mrb[0].mxu0
    %v513 = vadd.f32 %v434, %v512
    %v514 = vpop.f32.mrb[0].mxu0
    %515 = vmatprep.mubr.f32.mxu0 %v348
    %516 = vmatmul.mubr.f32.gmra.mrb[0].mxu0 %v347
    %v517 = vpop.f32.mrb[0].mxu0
    %v518 = vadd.f32 %v434, %v517
    %v519 = vpop.f32.mrb[0].mxu0
    %520 = vmatprep.mubr.f32.mxu0 %v350
    %521 = vmatmul.mubr.f32.gmra.mrb[0].mxu0 %v349
    %v522 = vpop.f32.mrb[0].mxu0
    %v523 = vadd.f32 %v434, %v522
    %v524 = vpop.f32.mrb[0].mxu0
    %525 = vmatprep.mubr.f32.mxu0 %v352
    %526 = vmatmul.mubr.f32.gmra.mrb[0].mxu0 %v351
    %v527 = vpop.f32.mrb[0].mxu0
    %v528 = vadd.f32 %v434, %v527
    %v529 = vpop.f32.mrb[0].mxu0
    %530 = vmatprep.mubr.f32.mxu0 %v354
    %531 = vmatmul.mubr.f32.gmra.mrb[0].mxu0 %v353
    %v532 = vpop.f32.mrb[0].mxu0
    %v533 = vadd.f32 %v434, %v532
    %v534 = vpop.f32.mrb[0].mxu0
    %535 = vdwg.mxu0
    %v536 = vmul.f32 %v384, %v503
    %v537 = vmul.f32 %v386, %v508
    %v538 = vmul.f32 %v388, %v513
    %v539 = vmul.f32 %v390, %v518
    %v540 = vmul.f32 %v392, %v523
    %v541 = vmul.f32 %v394, %v528
    %v542 = vmul.f32 %v396, %v533
    %543 = vst [vmem:[#allocation8] sm:$0xff] %v536
    %544 = vst [vmem:[#allocation8 + $0x8] sm:$0xff] %v537
    %545 = vst [vmem:[#allocation8 + $0x10] sm:$0xff] %v538
    %546 = vst [vmem:[#allocation8 + $0x18] sm:$0xff] %v539
    %547 = vst [vmem:[#allocation8 + $0x20] sm:$0xff] %v540
    %548 = vst [vmem:[#allocation8 + $0x28] sm:$0xff] %v541
    %549 = vst [vmem:[#allocation8 + $0x30] sm:$0xff] %v542
    // Predicated region
    $region34: #{tpu_custom_call.1} parent=1 // pred_check
      _
    $region35: #{tpu_custom_call.1} parent=1 // pred_check_branch
      %551 = sbr.rel (0) target = $region37
    $region36: #{tpu_custom_call.1} parent=1 // pred_region
      %s553 = ssub.s32 896, 896
      %554 = vsyncadd [#allocation4], %s553
      %s555 = sshll.u32 [#allocation8], 4
      %s556 = int_to_ptr.vmem [resolvable:$true] %s555
      %561 = dma.vmem_to_hbm [thread:$0]  %s556, 896, %s5, [#allocation4], 128, 128, 8
    $region37: #{tpu_custom_call.1} parent=1 // pred_fallthru
      _
    // Predicated region
    $region38: #{tpu_custom_call.1} parent=1 // pred_check
      _
    $region39: #{tpu_custom_call.1} parent=1 // pred_check_branch
      %563 = sbr.rel (0) target = $region41
    $region40: #{tpu_custom_call.1} parent=1 // pred_region
      %564 = dma.done [#allocation4], 896
    $region41: #{tpu_custom_call.1} parent=1 // pred_fallthru
      _
    %565 = vsyncpa [#allocation3], 1
    %566 = vsyncpa [#allocation6], 1
    %567 = vsyncpa [#allocation4], 1

</llo_original>
